<compile_context>
chip_gen: v7x
topology: tpu7x:2x2x1
jax: 0.10.0
libtpu: 0.0.40
codegen_flags: <defaults>
</compile_context>

<pallas_src>
import functools
from typing import NamedTuple

import jax
import jax.numpy as jnp
from jax.experimental import pallas as pl
from jax.experimental.pallas import tpu as pltpu


def _round_up(x, m):
    return ((x + m - 1) // m) * m


# ------------------------ chip-generation configuration ---------------------

def _tpu_config():
    """VMEM budget / preferred tiles per TPU generation.

    128 MiB VMEM parts (v5e/v6e): large tiles, ~112 MiB usable.
     64 MiB VMEM parts (v7x):     moderate tiles, ~52 MiB usable, 2 TCs/chip.
    """
    vmem_cap = 64 * 1024 * 1024                      # conservative fallback
    try:
        vmem_cap = int(pltpu.get_tpu_info().vmem_capacity_bytes)
    except Exception:
        pass
    small_vmem = vmem_cap <= 96 * 1024 * 1024        # v7x-class part
    if small_vmem:
        budget = max(vmem_cap - 12 * 1024 * 1024, 32 * 1024 * 1024)
        pref_tile_m, pref_tile_f = 256, 512          # 3.2 TB/s HBM: AI~256 ok
        two_cores = True
    else:
        budget = max(vmem_cap - 16 * 1024 * 1024, 48 * 1024 * 1024)
        pref_tile_m, pref_tile_f = 512, 1024         # v6e needs ~650 FLOP/byte
        two_cores = False
    return budget, pref_tile_m, pref_tile_f, two_cores


def _select_tiles(d_modelp, d_ff128, is_gated, w_bytes, pref_tm, pref_tf,
                  budget):
    """d_model-aware tile choice: shrink tile_f before tile_m (arithmetic
    intensity w.r.t. streamed weights scales with tile_m, not tile_f)."""
    gate = 2 if is_gated else 1
    tm_cands = sorted({t for t in (pref_tm, 512, 384, 256, 128)
                       if t <= pref_tm}, reverse=True)
    tf_cands = sorted({min(t, d_ff128) for t in (pref_tf, 1024, 512, 256, 128)
                       if t <= max(pref_tf, 128)}, reverse=True)
    for tm in tm_cands:
        for tf in tf_cands:
            w_cols = gate * tf
            per_step = (2 * tm * d_modelp * 4                # x + out tiles
                        + d_modelp * w_cols * w_bytes        # fused W1(|Wv)
                        + tf * d_modelp * w_bytes            # W2 tile
                        + (w_cols + d_modelp) * w_bytes * 8) # biases (padded)
            est = (2 * per_step                              # double-buffered
                   + tm * d_modelp * 4                       # f32 accumulator
                   + tm * w_cols * 4                         # hv intermediate
                   + tm * tf * max(w_bytes, 2))              # gated temp
            if est <= budget:
                return tm, tf
    return 128, 128


class FFNMeta(NamedTuple):
    d_model: int
    d_ff: int
    d_modelp: int
    d_ffp: int
    tile_f: int
    tile_m_pref: int
    is_gated: bool
    two_cores: bool
    vmem_limit: int


# ----------------------------- Pallas kernels ------------------------------

def _ffn_kernel(x_ref, w1_ref, b1_ref, w2_ref, b2_ref, o_ref, acc_ref):
    """One (row-tile, f-tile) step of relu(x@W1+b1) @ W2 + b2."""
    f = pl.program_id(1)

    @pl.when(f == 0)
    def _():
        acc_ref[...] = jnp.zeros_like(acc_ref)

    x = x_ref[...]
    h = jnp.dot(x, w1_ref[...], preferred_element_type=jnp.float32) + b1_ref[...]
    g = jnp.maximum(h, 0.0)                                  # ReLU
    acc_ref[...] += jnp.dot(g.astype(w2_ref.dtype), w2_ref[...],
                            preferred_element_type=jnp.float32)

    @pl.when(f == pl.num_programs(1) - 1)
    def _():
        o_ref[...] = (acc_ref[...] + b2_ref[...]).astype(o_ref.dtype)


def _ffn_gated_kernel(tile_f, x_ref, w1v_ref, b1v_ref, w2_ref, b2_ref, o_ref,
                      acc_ref):
    """Gated step: (relu(x@W1+b1) * (x@Wv+bv)) @ W2 + b2, with W1|Wv fused
    into a single [d_model, 2*tile_f] weight block (one wide MXU pass)."""
    f = pl.program_id(1)

    @pl.when(f == 0)
    def _():
        acc_ref[...] = jnp.zeros_like(acc_ref)

    x = x_ref[...]
    hv = jnp.dot(x, w1v_ref[...], preferred_element_type=jnp.float32) + b1v_ref[...]
    g = jnp.maximum(hv[:, :tile_f], 0.0)                     # ReLU half
    v = hv[:, tile_f:]                                       # gate half
    gated = g * v
    acc_ref[...] += jnp.dot(gated.astype(w2_ref.dtype), w2_ref[...],
                            preferred_element_type=jnp.float32)

    @pl.when(f == pl.num_programs(1) - 1)
    def _():
        o_ref[...] = (acc_ref[...] + b2_ref[...]).astype(o_ref.dtype)


# --------------------------- one-time weight packing ------------------------

def pack_ffn_params(params, *, is_gated=False):
    """Pad / interleave the FFN weights ONCE (call outside the hot path)."""
    d_model, d_ff = params["w1"].shape
    w_dtype = params["w1"].dtype
    budget, pref_tm, pref_tf, two_cores = _tpu_config()

    d_modelp = _round_up(d_model, 128)
    d_ff128 = _round_up(d_ff, 128)
    tile_m_pref, tile_f = _select_tiles(
        d_modelp, d_ff128, is_gated, jnp.dtype(w_dtype).itemsize,
        pref_tm, pref_tf, budget)
    d_ffp = _round_up(d_ff, tile_f)
    n_f = d_ffp // tile_f

    def pad2(a, rows, cols):
        return jnp.pad(a, ((0, rows - a.shape[0]), (0, cols - a.shape[1])))

    w1 = pad2(params["w1"], d_modelp, d_ffp)
    b1 = pad2(params["b1"], 1, d_ffp)
    packed = {
        "w2": pad2(params["w2"], d_ffp, d_modelp),
        "b2": pad2(params["b2"], 1, d_modelp),
    }
    if is_gated:
        wv = pad2(params["wv"], d_modelp, d_ffp)
        bv = pad2(params["bv"], 1, d_ffp)
        # Per-f-tile interleave [W1_t0 | Wv_t0 | W1_t1 | Wv_t1 | ...]: block f
        # of width 2*tile_f picks up both halves in one contiguous DMA.
        packed["w1v"] = jnp.concatenate(
            [w1.reshape(d_modelp, n_f, tile_f),
             wv.reshape(d_modelp, n_f, tile_f)], axis=-1,
        ).reshape(d_modelp, 2 * d_ffp)
        packed["b1v"] = jnp.concatenate(
            [b1.reshape(1, n_f, tile_f), bv.reshape(1, n_f, tile_f)], axis=-1,
        ).reshape(1, 2 * d_ffp)
    else:
        packed["w1"] = w1
        packed["b1"] = b1

    # Materialize now so the padded copies are paid exactly once.
    packed = jax.tree_util.tree_map(
        lambda a: jax.block_until_ready(jnp.asarray(a)), packed)

    meta = FFNMeta(int(d_model), int(d_ff), d_modelp, d_ffp, tile_f,
                   tile_m_pref, bool(is_gated), bool(two_cores), int(budget))
    return packed, meta


# --------------------------------- forward ----------------------------------

@functools.partial(jax.jit, static_argnames=("meta",))
def feed_forward(x, packed, meta: FFNMeta):
    """x: [batch, seq_len, d_model] -> [batch, seq_len, d_model]."""
    B, S, _ = x.shape
    M = B * S
    d_modelp, d_ffp, tile_f = meta.d_modelp, meta.d_ffp, meta.tile_f
    n_f = d_ffp // tile_f

    # Row tiling: full MXU granularity for real workloads, minimal padding for
    # tiny (decode-like) M, and >=2 m-tiles on dual-TensorCore parts.
    if M >= 128:
        tile_m = min(meta.tile_m_pref, _round_up(M, 128))
        if meta.two_cores:
            while tile_m > 128 and (M + tile_m - 1) // tile_m < 2:
                tile_m //= 2
    else:
        tile_m = _round_up(M, 16)
    Mp = _round_up(M, tile_m)
    n_m = Mp // tile_m

    x2d = x.reshape(M, meta.d_model)
    x2d = jnp.pad(x2d, ((0, Mp - M), (0, d_modelp - meta.d_model)))

    row_spec = pl.BlockSpec((tile_m, d_modelp), lambda i, f: (i, 0))
    out_spec = pl.BlockSpec((tile_m, d_modelp), lambda i, f: (i, 0))
    w2_spec = pl.BlockSpec((tile_f, d_modelp), lambda i, f: (f, 0))
    b2_spec = pl.BlockSpec((1, d_modelp), lambda i, f: (0, 0))

    if meta.is_gated:
        kernel = functools.partial(_ffn_gated_kernel, tile_f)
        in_specs = [
            row_spec,
            pl.BlockSpec((d_modelp, 2 * tile_f), lambda i, f: (0, f)),
            pl.BlockSpec((1, 2 * tile_f), lambda i, f: (0, f)),
            w2_spec, b2_spec,
        ]
        args = (x2d, packed["w1v"], packed["b1v"], packed["w2"], packed["b2"])
    else:
        kernel = _ffn_kernel
        in_specs = [
            row_spec,
            pl.BlockSpec((d_modelp, tile_f), lambda i, f: (0, f)),
            pl.BlockSpec((1, tile_f), lambda i, f: (0, f)),
            w2_spec, b2_spec,
        ]
        args = (x2d, packed["w1"], packed["b1"], packed["w2"], packed["b2"])

    # Advisory cost: weights re-streamed per m-tile (output-stationary kernel).
    w_bytes = sum(int(a.size) * jnp.dtype(a.dtype).itemsize for a in args[1:])
    act_bytes = 2 * Mp * d_modelp * jnp.dtype(x.dtype).itemsize
    flops = 2 * Mp * d_modelp * d_ffp * (3 if meta.is_gated else 2)
    cost = pl.CostEstimate(flops=flops, transcendentals=0,
                           bytes_accessed=act_bytes + n_m * w_bytes)

    out2d = pl.pallas_call(
        kernel,
        out_shape=jax.ShapeDtypeStruct((Mp, d_modelp), x.dtype),
        grid_spec=pltpu.PrefetchScalarGridSpec(
            num_scalar_prefetch=0,
            grid=(n_m, n_f),                      # reduction axis (d_ff) last
            in_specs=in_specs,
            out_specs=out_spec,
            scratch_shapes=[pltpu.VMEM((tile_m, d_modelp), jnp.float32)],
        ),
        compiler_params=pltpu.CompilerParams(
            dimension_semantics=("parallel", "arbitrary"),
            vmem_limit_bytes=int(meta.vmem_limit)),
        cost_estimate=cost,
    )(*args)

    return out2d[:M, :meta.d_model].reshape(B, S, meta.d_model)


# --------------------------- Parameter creation -----------------------------

def init_params(key, d_model, d_ff, is_gated=False, dtype=jnp.float32):
    """Deterministic init mimicking nn.Linear's U(-1/sqrt(fan_in), ...)."""
    ks = jax.random.split(key, 6)
    lim1 = 1.0 / jnp.sqrt(d_model)
    lim2 = 1.0 / jnp.sqrt(d_ff)
    params = {
        # stored as (in, out) so the kernel does x @ W (== torch x @ W.T)
        "w1": jax.random.uniform(ks[0], (d_model, d_ff), dtype, -lim1, lim1),
        "b1": jax.random.uniform(ks[1], (1, d_ff), dtype, -lim1, lim1),
        "w2": jax.random.uniform(ks[2], (d_ff, d_model), dtype, -lim2, lim2),
        "b2": jax.random.uniform(ks[3], (1, d_model), dtype, -lim2, lim2),
    }
    if is_gated:
        params["wv"] = jax.random.uniform(ks[4], (d_model, d_ff), dtype,
                                          -lim1, lim1)
        params["bv"] = jax.random.uniform(ks[5], (1, d_ff), dtype, -lim1, lim1)
    return params


def _reference(x, params, is_gated):
    """Pure-JAX reference of the PyTorch forward (eval-mode dropout)."""
    g = jnp.maximum(x @ params["w1"] + params["b1"][0], 0.0)
    h = g * (x @ params["wv"] + params["bv"][0]) if is_gated else g
    return h @ params["w2"] + params["b2"][0]


# --------------------------------- Main --------------------------------------

if __name__ == "__main__":
    key = jax.random.PRNGKey(0)
    k_x, k_p, k_pg = jax.random.split(key, 3)

    batch, seq_len, d_model, d_ff = 2, 8, 32, 64
    x = jax.random.normal(k_x, (batch, seq_len, d_model), jnp.float32)

    ok = True

    # non-gated (default) FFN, f32 — weights packed once, reused across calls
    params = init_params(k_p, d_model, d_ff, is_gated=False)
    packed, meta = pack_ffn_params(params, is_gated=False)
    out = feed_forward(x, packed, meta)
    jax.block_until_ready(out)
    ref = _reference(x, params, is_gated=False)
    ok &= bool(jnp.allclose(out, ref, atol=1e-4, rtol=1e-4))
    assert out.shape == (batch, seq_len, d_model)

    # gated FFN (is_gated=True branch), f32
    params_g = init_params(k_pg, d_model, d_ff, is_gated=True)
    packed_g, meta_g = pack_ffn_params(params_g, is_gated=True)
    out_g = feed_forward(x, packed_g, meta_g)
    jax.block_until_ready(out_g)
    ref_g = _reference(x, params_g, is_gated=True)
    ok &= bool(jnp.allclose(out_g, ref_g, atol=1e-4, rtol=1e-4))
    assert out_g.shape == (batch, seq_len, d_model)

    # gated FFN with bf16 weights/activations (production dtype; f32 acc)
    x_bf = x.astype(jnp.bfloat16)
    params_bf = jax.tree_util.tree_map(lambda a: a.astype(jnp.bfloat16),
                                       params_g)
    packed_bf, meta_bf = pack_ffn_params(params_bf, is_gated=True)
    out_bf = feed_forward(x_bf, packed_bf, meta_bf)
    jax.block_until_ready(out_bf)
    ref_bf = _reference(
        x_bf.astype(jnp.float32),
        jax.tree_util.tree_map(lambda a: a.astype(jnp.float32), params_bf),
        is_gated=True)
    ok &= bool(jnp.allclose(out_bf.astype(jnp.float32), ref_bf,
                            atol=1e-1, rtol=1e-1))
    assert out_bf.shape == (batch, seq_len, d_model)

    if ok:
        print("KERNEL_OK")
</pallas_src>

<mosaic_0001>
module attributes {stable_mosaic.version = 11 : i64} {
  func.func @_ffn_kernel(%arg0: i32, %arg1: i32, %arg2: memref<16x128xf32, #tpu.memory_space<vmem>>, %arg3: memref<128x128xf32, #tpu.memory_space<vmem>>, %arg4: memref<1x128xf32, #tpu.memory_space<vmem>>, %arg5: memref<128x128xf32, #tpu.memory_space<vmem>>, %arg6: memref<1x128xf32, #tpu.memory_space<vmem>>, %arg7: memref<16x128xf32, #tpu.memory_space<vmem>>, %arg8: memref<16x128xf32, #tpu.memory_space<vmem>>) attributes {dimension_semantics = [#tpu.dimension_semantics<parallel>, #tpu.dimension_semantics<arbitrary>], iteration_bounds = array<i64: 1, 1>, scalar_prefetch = 0 : i64, scratch_operands = 1 : i64, tpu.core_type = #tpu.core_type<tc>, window_params = [{transform_indices = @transform_0, window_bounds = array<i64: 16, 128>}, {transform_indices = @transform_1, window_bounds = array<i64: 128, 128>}, {transform_indices = @transform_2, window_bounds = array<i64: 1, 128>}, {transform_indices = @transform_3, window_bounds = array<i64: 128, 128>}, {pipeline_mode = #tpu.pipeline_mode<synchronous>, transform_indices = @transform_4, window_bounds = array<i64: 1, 128>}, {transform_indices = @transform_5, window_bounds = array<i64: 16, 128>}]} {
    %c0_i32 = arith.constant 0 : i32
    %0 = arith.cmpi eq, %arg1, %c0_i32 : i32
    %1 = arith.extui %0 : i1 to i32
    %c0_i32_0 = arith.constant 0 : i32
    %2 = arith.cmpi ne, %1, %c0_i32_0 : i32
    scf.if %2 {
      %cst_16 = arith.constant 0.000000e+00 : f32
      %19 = vector.broadcast %cst_16 : f32 to vector<16x128xf32>
      %c0_17 = arith.constant 0 : index
      %c0_18 = arith.constant 0 : index
      %20 = vector.load %arg8[%c0_17, %c0_18] : memref<16x128xf32, #tpu.memory_space<vmem>>, vector<16x128xf32>
      tpu.vector_store %arg8[%c0_17, %c0_18], %19 {strides = array<i32>} : memref<16x128xf32, #tpu.memory_space<vmem>>, vector<16x128xf32>,
    } else {
    }
    %c0 = arith.constant 0 : index
    %c0_1 = arith.constant 0 : index
    %3 = vector.load %arg2[%c0, %c0_1] : memref<16x128xf32, #tpu.memory_space<vmem>>, vector<16x128xf32>
    %c0_2 = arith.constant 0 : index
    %c0_3 = arith.constant 0 : index
    %4 = vector.load %arg3[%c0_2, %c0_3] : memref<128x128xf32, #tpu.memory_space<vmem>>, vector<128x128xf32>
    %cst = arith.constant dense<0.000000e+00> : vector<16x128xf32>
    %5 = tpu.matmul %3, %4, %cst {dimension_numbers = #tpu.dot_dimension_numbers<[1], [0], [0], [1], [0, 0, 1, 1], [], []>} : vector<16x128xf32>, vector<128x128xf32>, vector<16x128xf32> -> vector<16x128xf32>
    %c0_4 = arith.constant 0 : index
    %c0_5 = arith.constant 0 : index
    %6 = vector.load %arg4[%c0_4, %c0_5] : memref<1x128xf32, #tpu.memory_space<vmem>>, vector<1x128xf32>
    %7 = vector.broadcast %6 : vector<1x128xf32> to vector<16x128xf32>
    %8 = arith.addf %5, %7 : vector<16x128xf32>
    %cst_6 = arith.constant 0.000000e+00 : f32
    %9 = vector.broadcast %cst_6 : f32 to vector<16x128xf32>
    %10 = arith.maximumf %8, %9 : vector<16x128xf32>
    %c0_7 = arith.constant 0 : index
    %c0_8 = arith.constant 0 : index
    %11 = vector.load %arg8[%c0_7, %c0_8] : memref<16x128xf32, #tpu.memory_space<vmem>>, vector<16x128xf32>
    %c0_9 = arith.constant 0 : index
    %c0_10 = arith.constant 0 : index
    %12 = vector.load %arg5[%c0_9, %c0_10] : memref<128x128xf32, #tpu.memory_space<vmem>>, vector<128x128xf32>
    %cst_11 = arith.constant dense<0.000000e+00> : vector<16x128xf32>
    %13 = tpu.matmul %10, %12, %cst_11 {dimension_numbers = #tpu.dot_dimension_numbers<[1], [0], [0], [1], [0, 0, 1, 1], [], []>} : vector<16x128xf32>, vector<128x128xf32>, vector<16x128xf32> -> vector<16x128xf32>
    %14 = arith.addf %11, %13 : vector<16x128xf32>
    %c0_12 = arith.constant 0 : index
    %c0_13 = arith.constant 0 : index
    %15 = vector.load %arg8[%c0_12, %c0_13] : memref<16x128xf32, #tpu.memory_space<vmem>>, vector<16x128xf32>
    tpu.vector_store %arg8[%c0_12, %c0_13], %14 {strides = array<i32>} : memref<16x128xf32, #tpu.memory_space<vmem>>, vector<16x128xf32>,
    %c0_i32_14 = arith.constant 0 : i32
    %16 = arith.cmpi eq, %arg1, %c0_i32_14 : i32
    %17 = arith.extui %16 : i1 to i32
    %c0_i32_15 = arith.constant 0 : i32
    %18 = arith.cmpi ne, %17, %c0_i32_15 : i32
    scf.if %18 {
      %c0_16 = arith.constant 0 : index
      %c0_17 = arith.constant 0 : index
      %19 = vector.load %arg8[%c0_16, %c0_17] : memref<16x128xf32, #tpu.memory_space<vmem>>, vector<16x128xf32>
      %c0_18 = arith.constant 0 : index
      %c0_19 = arith.constant 0 : index
      %20 = vector.load %arg6[%c0_18, %c0_19] : memref<1x128xf32, #tpu.memory_space<vmem>>, vector<1x128xf32>
      %21 = vector.broadcast %20 : vector<1x128xf32> to vector<16x128xf32>
      %22 = arith.addf %19, %21 : vector<16x128xf32>
      %c0_20 = arith.constant 0 : index
      %c0_21 = arith.constant 0 : index
      %23 = vector.load %arg7[%c0_20, %c0_21] : memref<16x128xf32, #tpu.memory_space<vmem>>, vector<16x128xf32>
      tpu.vector_store %arg7[%c0_20, %c0_21], %22 {strides = array<i32>} : memref<16x128xf32, #tpu.memory_space<vmem>>, vector<16x128xf32>,
    } else {
    }
    return
  }
  func.func @transform_0(%arg0: i32, %arg1: i32) -> (i32, i32) {
    %c0_i32 = arith.constant 0 : i32
    %c0_i32_0 = arith.constant 0 : i32
    return %arg0, %c0_i32 : i32, i32
  }
  func.func @transform_1(%arg0: i32, %arg1: i32) -> (i32, i32) {
    %c0_i32 = arith.constant 0 : i32
    %c0_i32_0 = arith.constant 0 : i32
    return %c0_i32, %arg1 : i32, i32
  }
  func.func @transform_2(%arg0: i32, %arg1: i32) -> (i32, i32) {
    %c0_i32 = arith.constant 0 : i32
    %c0_i32_0 = arith.constant 0 : i32
    return %c0_i32, %arg1 : i32, i32
  }
  func.func @transform_3(%arg0: i32, %arg1: i32) -> (i32, i32) {
    %c0_i32 = arith.constant 0 : i32
    %c0_i32_0 = arith.constant 0 : i32
    return %arg1, %c0_i32 : i32, i32
  }
  func.func @transform_4(%arg0: i32, %arg1: i32) -> (i32, i32) {
    %c0_i32 = arith.constant 0 : i32
    %c0_i32_0 = arith.constant 0 : i32
    %c0_i32_1 = arith.constant 0 : i32
    return %c0_i32, %c0_i32_0 : i32, i32
  }
  func.func @transform_5(%arg0: i32, %arg1: i32) -> (i32, i32) {
    %c0_i32 = arith.constant 0 : i32
    %c0_i32_0 = arith.constant 0 : i32
    return %arg0, %c0_i32 : i32, i32
  }
}

</mosaic_0001>

<llo_original>
// kernel: feed_forward.1
$region0: #{feed_forward.1}
  #allocation0 [shape = 'u32[]', space=smem, size = 0x4, offset = 0x4, fixed_abs, tag = 'smem constant byte address 0x4 - core index']
  #allocation1 [shape = 'u32[144,128]{1,0:T(1,128)}', space=vmem, size = 0x12000, scoped, tag = 'internal scratch']
  #allocation2 [shape = 'f32[16,128]{1,0:T(8,128)}', space=vmem, size = 0x2000, scoped, tag = 'scratch operand']
  %s0 = inlined_call_operand.vmem [shape: f32[16,128], index: 0, kind: input, shape index: {}]
  %s1 = inlined_call_operand.hbm [shape: f32[128,128], index: 1, kind: input, shape index: {}]
  %s2 = inlined_call_operand.vmem [shape: f32[1,128], index: 2, kind: input, shape index: {}]
  %s3 = inlined_call_operand.hbm [shape: f32[128,128], index: 3, kind: input, shape index: {}]
  %s4 = inlined_call_operand.vmem [shape: f32[1,128], index: 4, kind: input, shape index: {}]
  %s5 = inlined_call_operand.vmem [shape: f32[16,128], index: 5, kind: output, shape index: {}]
  %s6 = sld [smem:[#allocation0]]
  $region46: #{feed_forward.1} parent=0
    _
  %s8 = ssub.s32 1, %s6
  %s9 = scalar_select 0, %s8, %s6
  $region1: #{feed_forward.1} parent=0
    #allocation3 [shape = 'u8[65536]{0}', space=vmem, size = 0x10000, scoped, tag = 'input window, operand 1, single buffered']
    #allocation4 [shape = 's32[1]{0}', space=sflag, size = 0x4, scoped, tag = 'scoped memory for feed_forward.1']
    #allocation5 [shape = 'u8[65536]{0}', space=vmem, size = 0x10000, scoped, tag = 'input window, operand 3, single buffered']
    #allocation6 [shape = 's32[1]{0}', space=sflag, size = 0x4, scoped, tag = 'scoped memory for feed_forward.1']
    %10 = vsyncpa [#allocation4], 0
    %11 = vsyncpa [#allocation6], 0
    // Predicated region
    $region2: #{feed_forward.1} parent=1 // pred_check
      _
    $region3: #{feed_forward.1} parent=1 // pred_check_branch
      %13 = sbr.rel (0) target = $region5
    $region4: #{feed_forward.1} parent=1 // pred_region
      _
    $region5: #{feed_forward.1} parent=1 // pred_fallthru
      _
    // Predicated region
    $region6: #{feed_forward.1} parent=1 // pred_check
      _
    $region7: #{feed_forward.1} parent=1 // pred_check_branch
      %15 = sbr.rel (0) target = $region9
    $region8: #{feed_forward.1} parent=1 // pred_region
      %s17 = ssub.s32 2048, 2048
      %18 = vsyncadd [#allocation4], %s17
      %s19 = sshll.u32 [#allocation3], 4
      %s20 = int_to_ptr.vmem [resolvable:$true] %s19
      %25 = dma.hbm_to_vmem [thread:$0]  %s1, 2048, %s20, [#allocation4], 128, 128, 8
    $region9: #{feed_forward.1} parent=1 // pred_fallthru
      _
    // Predicated region
    $region10: #{feed_forward.1} parent=1 // pred_check
      _
    $region11: #{feed_forward.1} parent=1 // pred_check_branch
      %27 = sbr.rel (0) target = $region13
    $region12: #{feed_forward.1} parent=1 // pred_region
      _
    $region13: #{feed_forward.1} parent=1 // pred_fallthru
      _
    // Predicated region
    $region14: #{feed_forward.1} parent=1 // pred_check
      _
    $region15: #{feed_forward.1} parent=1 // pred_check_branch
      %29 = sbr.rel (0) target = $region17
    $region16: #{feed_forward.1} parent=1 // pred_region
      %s31 = ssub.s32 2048, 2048
      %32 = vsyncadd [#allocation6], %s31
      %s33 = sshll.u32 [#allocation5], 4
      %s34 = int_to_ptr.vmem [resolvable:$true] %s33
      %39 = dma.hbm_to_vmem [thread:$0]  %s3, 2048, %s34, [#allocation6], 128, 128, 8
    $region17: #{feed_forward.1} parent=1 // pred_fallthru
      _
    // Predicated region
    $region18: #{feed_forward.1} parent=1 // pred_check
      _
    $region19: #{feed_forward.1} parent=1 // pred_check_branch
      %41 = sbr.rel (0) target = $region21
    $region20: #{feed_forward.1} parent=1 // pred_region
      _
    $region21: #{feed_forward.1} parent=1 // pred_fallthru
      _
    // Predicated region
    $region22: #{feed_forward.1} parent=1 // pred_check
      _
    $region23: #{feed_forward.1} parent=1 // pred_check_branch
      %43 = sbr.rel (0) target = $region25
    $region24: #{feed_forward.1} parent=1 // pred_region
      %44 = dma.done [#allocation4], 2048
    $region25: #{feed_forward.1} parent=1 // pred_fallthru
      _
    // Predicated region
    $region26: #{feed_forward.1} parent=1 // pred_check
      _
    $region27: #{feed_forward.1} parent=1 // pred_check_branch
      %46 = sbr.rel (0) target = $region29
    $region28: #{feed_forward.1} parent=1 // pred_region
      %47 = dma.done [#allocation6], 2048
    $region29: #{feed_forward.1} parent=1 // pred_fallthru
      _
    %p48 = scmp.eq.s32.totalorder 0, 0
    // Predicated region
    $region30: #{feed_forward.1} parent=1 // pred_check
      %p49 = pneg %p48
    $region31: #{feed_forward.1} parent=1 // pred_check_branch
      %51 = sbr.rel (%p49) target = $region33
    $region32: #{feed_forward.1} parent=1 // pred_region
      %52 = vst [vmem:[#allocation2] sm:$0xff] 0.0
      %53 = vst [vmem:[#allocation2 + $0x8] sm:$0xff] 0.0
    $region33: #{feed_forward.1} parent=1 // pred_fallthru
      _
    %v54 = vld [vmem:[%s0] sm:$0xff]
    %v55 = vld [vmem:[%s0 + $0x8] sm:$0xff]
    %v56 = vld [vmem:[#allocation3] sm:$0xff]
    %v57 = vld [vmem:[#allocation3 + $0x8] sm:$0xff]
    %v58 = vld [vmem:[#allocation3 + $0x10] sm:$0xff]
    %v59 = vld [vmem:[#allocation3 + $0x18] sm:$0xff]
    %v60 = vld [vmem:[#allocation3 + $0x20] sm:$0xff]
    %v61 = vld [vmem:[#allocation3 + $0x28] sm:$0xff]
    %v62 = vld [vmem:[#allocation3 + $0x30] sm:$0xff]
    %v63 = vld [vmem:[#allocation3 + $0x38] sm:$0xff]
    %v64 = vld [vmem:[#allocation3 + $0x40] sm:$0xff]
    %v65 = vld [vmem:[#allocation3 + $0x48] sm:$0xff]
    %v66 = vld [vmem:[#allocation3 + $0x50] sm:$0xff]
    %v67 = vld [vmem:[#allocation3 + $0x58] sm:$0xff]
    %v68 = vld [vmem:[#allocation3 + $0x60] sm:$0xff]
    %v69 = vld [vmem:[#allocation3 + $0x68] sm:$0xff]
    %v70 = vld [vmem:[#allocation3 + $0x70] sm:$0xff]
    %v71 = vld [vmem:[#allocation3 + $0x78] sm:$0xff]
    %v72 = vld [vmem:[%s2] sm:$0x1]
    %v74 = vlaneseq
    %v75 = vshrl.u32 %v74, 7
    %v76 = vsub.s32 0, %v75
    %v77 = vrot.slane %v72, %v76
    %79 = vmatprep.subr.mxu0 0.0
    %80 = vmatpush1.msra.mxu0 %v56
    %81 = vmatprep.subr.mxu0 0.0
    %82 = vmatpush1.msra.mxu0 %v57
    %83 = vmatprep.subr.mxu0 0.0
    %84 = vmatpush1.msra.mxu0 %v58
    %85 = vmatprep.subr.mxu0 0.0
    %86 = vmatpush1.msra.mxu0 %v59
    %87 = vmatprep.subr.mxu0 0.0
    %88 = vmatpush1.msra.mxu0 %v60
    %89 = vmatprep.subr.mxu0 0.0
    %90 = vmatpush1.msra.mxu0 %v61
    %91 = vmatprep.subr.mxu0 0.0
    %92 = vmatpush1.msra.mxu0 %v62
    %93 = vmatprep.subr.mxu0 0.0
    %94 = vmatpush1.msra.mxu0 %v63
    %95 = vmatprep.subr.mxu0 0.0
    %96 = vmatpush1.msra.mxu0 %v64
    %97 = vmatprep.subr.mxu0 0.0
    %98 = vmatpush1.msra.mxu0 %v65
    %99 = vmatprep.subr.mxu0 0.0
    %100 = vmatpush1.msra.mxu0 %v66
    %101 = vmatprep.subr.mxu0 0.0
    %102 = vmatpush1.msra.mxu0 %v67
    %103 = vmatprep.subr.mxu0 0.0
    %104 = vmatpush1.msra.mxu0 %v68
    %105 = vmatprep.subr.mxu0 0.0
    %106 = vmatpush1.msra.mxu0 %v69
    %107 = vmatprep.subr.mxu0 0.0
    %108 = vmatpush1.msra.mxu0 %v70
    %109 = vmatprep.subr.mxu0 0.0
    %110 = vmatpush1.msra.mxu0 %v71
    %111 = vmatprep.subr.mxu0 0.0
    %112 = vmatpush1.msra.mxu0 0.0
    %113 = vmatprep.subr.mxu0 0.0
    %114 = vmatpush1.msra.mxu0 0.0
    %115 = vmatprep.subr.mxu0 0.0
    %116 = vmatpush1.msra.mxu0 0.0
    %117 = vmatprep.subr.mxu0 0.0
    %118 = vmatpush1.msra.mxu0 0.0
    %119 = vmatprep.subr.mxu0 0.0
    %120 = vmatpush1.msra.mxu0 0.0
    %121 = vmatprep.subr.mxu0 0.0
    %122 = vmatpush1.msra.mxu0 0.0
    %123 = vmatprep.subr.mxu0 0.0
    %124 = vmatpush1.msra.mxu0 0.0
    %125 = vmatprep.subr.mxu0 0.0
    %126 = vmatpush1.msra.mxu0 0.0
    %127 = vmatprep.subr.mxu0 0.0
    %128 = vmatpush1.msra.mxu0 0.0
    %129 = vmatprep.subr.mxu0 0.0
    %130 = vmatpush1.msra.mxu0 0.0
    %131 = vmatprep.subr.mxu0 0.0
    %132 = vmatpush1.msra.mxu0 0.0
    %133 = vmatprep.subr.mxu0 0.0
    %134 = vmatpush1.msra.mxu0 0.0
    %135 = vmatprep.subr.mxu0 0.0
    %136 = vmatpush1.msra.mxu0 0.0
    %137 = vmatprep.subr.mxu0 0.0
    %138 = vmatpush1.msra.mxu0 0.0
    %139 = vmatprep.subr.mxu0 0.0
    %140 = vmatpush1.msra.mxu0 0.0
    %141 = vmatprep.subr.mxu0 0.0
    %142 = vmatpush1.msra.mxu0 0.0
    %143 = vmatprep.mubr.f32.mxu0 0.0
    %144 = vmatmul.mubr.f32.gmra.mrb[0].mxu0 %v54
    %v145 = vpop.f32.mrb[0].mxu0
    %v146 = vadd.f32 %v77, %v145
    %v147 = vpop.f32.mrb[0].mxu0
    %148 = vmatprep.mubr.f32.mxu0 0.0
    %149 = vmatmul.mubr.f32.gmra.mrb[0].mxu0 %v55
    %v150 = vpop.f32.mrb[0].mxu0
    %v151 = vadd.f32 %v77, %v150
    %v152 = vpop.f32.mrb[0].mxu0
    %153 = vdwg.mxu0
    %v154 = vmax.f32 %v146, 0.0
    %v155 = vmax.f32 %v151, 0.0
    %v156 = vld [vmem:[#allocation2] sm:$0xff]
    %v157 = vld [vmem:[#allocation2 + $0x8] sm:$0xff]
    %v158 = vld [vmem:[#allocation5] sm:$0xff]
    %v159 = vld [vmem:[#allocation5 + $0x8] sm:$0xff]
    %v160 = vld [vmem:[#allocation5 + $0x10] sm:$0xff]
    %v161 = vld [vmem:[#allocation5 + $0x18] sm:$0xff]
    %v162 = vld [vmem:[#allocation5 + $0x20] sm:$0xff]
    %v163 = vld [vmem:[#allocation5 + $0x28] sm:$0xff]
    %v164 = vld [vmem:[#allocation5 + $0x30] sm:$0xff]
    %v165 = vld [vmem:[#allocation5 + $0x38] sm:$0xff]
    %v166 = vld [vmem:[#allocation5 + $0x40] sm:$0xff]
    %v167 = vld [vmem:[#allocation5 + $0x48] sm:$0xff]
    %v168 = vld [vmem:[#allocation5 + $0x50] sm:$0xff]
    %v169 = vld [vmem:[#allocation5 + $0x58] sm:$0xff]
    %v170 = vld [vmem:[#allocation5 + $0x60] sm:$0xff]
    %v171 = vld [vmem:[#allocation5 + $0x68] sm:$0xff]
    %v172 = vld [vmem:[#allocation5 + $0x70] sm:$0xff]
    %v173 = vld [vmem:[#allocation5 + $0x78] sm:$0xff]
    %174 = vmatprep.subr.mxu0 0.0
    %175 = vmatpush1.msra.mxu0 %v158
    %176 = vmatprep.subr.mxu0 0.0
    %177 = vmatpush1.msra.mxu0 %v159
    %178 = vmatprep.subr.mxu0 0.0
    %179 = vmatpush1.msra.mxu0 %v160
    %180 = vmatprep.subr.mxu0 0.0
    %181 = vmatpush1.msra.mxu0 %v161
    %182 = vmatprep.subr.mxu0 0.0
    %183 = vmatpush1.msra.mxu0 %v162
    %184 = vmatprep.subr.mxu0 0.0
    %185 = vmatpush1.msra.mxu0 %v163
    %186 = vmatprep.subr.mxu0 0.0
    %187 = vmatpush1.msra.mxu0 %v164
    %188 = vmatprep.subr.mxu0 0.0
    %189 = vmatpush1.msra.mxu0 %v165
    %190 = vmatprep.subr.mxu0 0.0
    %191 = vmatpush1.msra.mxu0 %v166
    %192 = vmatprep.subr.mxu0 0.0
    %193 = vmatpush1.msra.mxu0 %v167
    %194 = vmatprep.subr.mxu0 0.0
    %195 = vmatpush1.msra.mxu0 %v168
    %196 = vmatprep.subr.mxu0 0.0
    %197 = vmatpush1.msra.mxu0 %v169
    %198 = vmatprep.subr.mxu0 0.0
    %199 = vmatpush1.msra.mxu0 %v170
    %200 = vmatprep.subr.mxu0 0.0
    %201 = vmatpush1.msra.mxu0 %v171
    %202 = vmatprep.subr.mxu0 0.0
    %203 = vmatpush1.msra.mxu0 %v172
    %204 = vmatprep.subr.mxu0 0.0
    %205 = vmatpush1.msra.mxu0 %v173
    %206 = vmatprep.subr.mxu0 0.0
    %207 = vmatpush1.msra.mxu0 0.0
    %208 = vmatprep.subr.mxu0 0.0
    %209 = vmatpush1.msra.mxu0 0.0
    %210 = vmatprep.subr.mxu0 0.0
    %211 = vmatpush1.msra.mxu0 0.0
    %212 = vmatprep.subr.mxu0 0.0
    %213 = vmatpush1.msra.mxu0 0.0
    %214 = vmatprep.subr.mxu0 0.0
    %215 = vmatpush1.msra.mxu0 0.0
    %216 = vmatprep.subr.mxu0 0.0
    %217 = vmatpush1.msra.mxu0 0.0
    %218 = vmatprep.subr.mxu0 0.0
    %219 = vmatpush1.msra.mxu0 0.0
    %220 = vmatprep.subr.mxu0 0.0
    %221 = vmatpush1.msra.mxu0 0.0
    %222 = vmatprep.subr.mxu0 0.0
    %223 = vmatpush1.msra.mxu0 0.0
    %224 = vmatprep.subr.mxu0 0.0
    %225 = vmatpush1.msra.mxu0 0.0
    %226 = vmatprep.subr.mxu0 0.0
    %227 = vmatpush1.msra.mxu0 0.0
    %228 = vmatprep.subr.mxu0 0.0
    %229 = vmatpush1.msra.mxu0 0.0
    %230 = vmatprep.subr.mxu0 0.0
    %231 = vmatpush1.msra.mxu0 0.0
    %232 = vmatprep.subr.mxu0 0.0
    %233 = vmatpush1.msra.mxu0 0.0
    %234 = vmatprep.subr.mxu0 0.0
    %235 = vmatpush1.msra.mxu0 0.0
    %236 = vmatprep.subr.mxu0 0.0
    %237 = vmatpush1.msra.mxu0 0.0
    %238 = vmatprep.mubr.f32.mxu0 0.0
    %239 = vmatmul.mubr.f32.gmra.mrb[0].mxu0 %v154
    %v240 = vpop.f32.mrb[0].mxu0
    %v241 = vadd.f32 0.0, %v240
    %v242 = vpop.f32.mrb[0].mxu0
    %243 = vmatprep.mubr.f32.mxu0 0.0
    %244 = vmatmul.mubr.f32.gmra.mrb[0].mxu0 %v155
    %v245 = vpop.f32.mrb[0].mxu0
    %v246 = vadd.f32 0.0, %v245
    %v247 = vpop.f32.mrb[0].mxu0
    %248 = vdwg.mxu0
    %v249 = vadd.f32 %v156, %v241
    %v250 = vadd.f32 %v157, %v246
    %251 = vst [vmem:[#allocation2] sm:$0xff] %v249
    %252 = vst [vmem:[#allocation2 + $0x8] sm:$0xff] %v250
    // Predicated region
    $region34: #{feed_forward.1} parent=1 // pred_check
      %p253 = pneg %p48
    $region35: #{feed_forward.1} parent=1 // pred_check_branch
      %255 = sbr.rel (%p253) target = $region37
    $region36: #{feed_forward.1} parent=1 // pred_region
      %v256 = vld [vmem:[#allocation2] sm:$0xff]
      %v257 = vld [vmem:[#allocation2 + $0x8] sm:$0xff]
      %v258 = vld [vmem:[%s4] sm:$0x1]
      %v260 = vlaneseq
      %v261 = vshrl.u32 %v260, 7
      %v262 = vsub.s32 0, %v261
      %v263 = vrot.slane %v258, %v262
      %v265 = vadd.f32 %v256, %v263
      %v266 = vadd.f32 %v257, %v263
      %267 = vst [vmem:[%s5] sm:$0xff] %v265
      %268 = vst [vmem:[%s5 + $0x8] sm:$0xff] %v266
    $region37: #{feed_forward.1} parent=1 // pred_fallthru
      _
    // Predicated region
    $region38: #{feed_forward.1} parent=1 // pred_check
      _
    $region39: #{feed_forward.1} parent=1 // pred_check_branch
      %270 = sbr.rel (0) target = $region41
    $region40: #{feed_forward.1} parent=1 // pred_region
      _
    $region41: #{feed_forward.1} parent=1 // pred_fallthru
      _
    // Predicated region
    $region42: #{feed_forward.1} parent=1 // pred_check
      _
    $region43: #{feed_forward.1} parent=1 // pred_check_branch
      %272 = sbr.rel (0) target = $region45
    $region44: #{feed_forward.1} parent=1 // pred_region
      _
    $region45: #{feed_forward.1} parent=1 // pred_fallthru
      _
    %273 = vsyncpa [#allocation4], 1
    %274 = vsyncpa [#allocation6], 1

</llo_original>
